<compile_context>
chip_gen: v5e
topology: v5e:2x2
jax: 0.10.0
libtpu: 0.0.40
codegen_flags: <defaults>
</compile_context>

<pallas_src>
import jax
import jax.numpy as jnp
from jax.experimental import pallas as pl
from jax.experimental.pallas import tpu as pltpu


def _discriminator_kernel(x_ref, w0_ref, b0_ref, w1t_ref, b1_ref, out_ref):
    # x_ref:   (tb, in_features)
    # w0_ref:  (in_features, hidden),  b0_ref: (1, hidden)
    # w1t_ref: (1, hidden)          ,  b1_ref: (1, 1)
    # out_ref: (tb, 1)

    # Layer 1 on the MXU, f32 accumulation.
    h = jnp.dot(x_ref[...], w0_ref[...], preferred_element_type=jnp.float32)
    h = h + b0_ref[...]
    # LeakyReLU(negative_slope=0.1): max(x, 0.1*x) is exact for slope in (0,1).
    h = jnp.maximum(h, 0.1 * h)

    # Layer 2 (hidden -> 1): per-row dot product as multiply + lane reduction
    # (cheaper and more robust than a 1-column matmul on the MXU).
    y = jnp.sum(h * w1t_ref[...], axis=-1, keepdims=True) + b1_ref[...]
    out_ref[...] = jax.nn.sigmoid(y).astype(out_ref.dtype)


def _pick_batch_tile(B):
    # Single grid step for small batches; otherwise the largest tile that
    # divides B (multiple of the f32 sublane count 8), capped at 512 so the
    # x/out tiles stay comfortably inside v7x's 64 MiB VMEM.
    if B <= 512:
        return B
    for tb in (512, 256, 128, 64, 32, 16, 8):
        if B % tb == 0:
            return tb
    return B  # fall back to one big tile


def discriminator_forward(data, w0, b0, w1, b1, *, tb=None,
                          compute_dtype=jnp.float32):
    """Pallas implementation of Discriminator.forward.

    data: (B, in_features) float32
    w0:   (in_features, hidden)   b0: (hidden,)
    w1:   (hidden, 1)             b1: (1,)
    compute_dtype: dtype of the x/w0 matmul operands (use jnp.bfloat16 on
        v6e/v7x for the fast MXU path; accumulation stays f32).
    """
    B, in_features = data.shape
    hidden = w0.shape[1]

    if tb is None:
        tb = _pick_batch_tile(B)
    assert B % tb == 0, "batch must be divisible by the batch tile"

    # Cast the matmul operands at the wrapper so the HBM->VMEM DMA already
    # carries the narrow dtype. Biases and the tiny output layer stay f32.
    x_c = data.astype(compute_dtype)
    w0_c = w0.astype(compute_dtype)
    b0_2d = b0.reshape(1, hidden).astype(jnp.float32)
    w1t = w1.reshape(1, hidden).astype(jnp.float32)   # (hidden,1) -> (1,hidden)
    b1_2d = b1.reshape(1, 1).astype(jnp.float32)

    # Weights/biases are grid-invariant: single-buffer them (no need for the
    # default double buffer that pipelining would allocate).
    def const_spec(shape):
        return pl.BlockSpec(shape, lambda i: (0, 0),
                            pipeline_mode=pl.Buffered(1))

    return pl.pallas_call(
        _discriminator_kernel,
        out_shape=jax.ShapeDtypeStruct((B, 1), data.dtype),
        grid_spec=pltpu.PrefetchScalarGridSpec(
            num_scalar_prefetch=0,
            grid=(B // tb,),
            in_specs=[
                pl.BlockSpec((tb, in_features), lambda i: (i, 0)),  # x tile
                const_spec((in_features, hidden)),                  # W0
                const_spec((1, hidden)),                            # b0
                const_spec((1, hidden)),                            # W1^T
                const_spec((1, 1)),                                 # b1
            ],
            out_specs=pl.BlockSpec((tb, 1), lambda i: (i, 0)),
        ),
        compiler_params=pltpu.CompilerParams(
            dimension_semantics=("parallel",)),
    )(x_c, w0_c, b0_2d, w1t, b1_2d)


def discriminator_reference(data, w0, b0, w1, b1):
    h = data @ w0 + b0
    h = jnp.where(h >= 0, h, 0.1 * h)          # LeakyReLU(0.1)
    return jax.nn.sigmoid(h @ w1 + b1)          # Sigmoid


if __name__ == "__main__":
    # Shapes implied by the module: in_features=128, hidden=32, out=1.
    B, in_features, hidden = 16, 128, 32

    key = jax.random.PRNGKey(0)
    k_x, k_w0, k_b0, k_w1, k_b1 = jax.random.split(key, 5)

    data = jax.random.normal(k_x, (B, in_features), dtype=jnp.float32)
    # Deterministic synthetic parameters (no checkpoint load).
    w0 = jax.random.normal(k_w0, (in_features, hidden), dtype=jnp.float32) * 0.1
    b0 = jax.random.normal(k_b0, (hidden,), dtype=jnp.float32) * 0.1
    w1 = jax.random.normal(k_w1, (hidden, 1), dtype=jnp.float32) * 0.1
    b1 = jax.random.normal(k_b1, (1,), dtype=jnp.float32) * 0.1

    ref = discriminator_reference(data, w0, b0, w1, b1)

    # f32 path (exact check).
    out_f32 = jax.block_until_ready(
        discriminator_forward(data, w0, b0, w1, b1))
    # bf16-operand path (fast MXU path on v6e/v7x; loose check).
    out_bf16 = jax.block_until_ready(
        discriminator_forward(data, w0, b0, w1, b1,
                              compute_dtype=jnp.bfloat16))

    ok = bool(jnp.allclose(out_f32, ref, atol=1e-5, rtol=1e-5)) and \
         bool(jnp.allclose(out_bf16, ref, atol=2e-2, rtol=2e-2))

    if ok:
        print("KERNEL_OK")
</pallas_src>

<mosaic_0001>
module attributes {stable_mosaic.version = 11 : i64} {
  func.func @_discriminator_kernel(%arg0: i32, %arg1: memref<16x128xf32, #tpu.memory_space<vmem>>, %arg2: memref<128x32xf32, #tpu.memory_space<vmem>>, %arg3: memref<1x32xf32, #tpu.memory_space<vmem>>, %arg4: memref<1x32xf32, #tpu.memory_space<vmem>>, %arg5: memref<1x1xf32, #tpu.memory_space<vmem>>, %arg6: memref<16x1xf32, #tpu.memory_space<vmem>>) attributes {dimension_semantics = [#tpu.dimension_semantics<parallel>], iteration_bounds = array<i64: 1>, scalar_prefetch = 0 : i64, scratch_operands = 0 : i64, tpu.core_type = #tpu.core_type<tc>, window_params = [{transform_indices = @transform_0, window_bounds = array<i64: 16, 128>}, {pipeline_mode = #tpu.pipeline_mode<synchronous>, transform_indices = @transform_1, window_bounds = array<i64: 128, 32>}, {pipeline_mode = #tpu.pipeline_mode<synchronous>, transform_indices = @transform_2, window_bounds = array<i64: 1, 32>}, {pipeline_mode = #tpu.pipeline_mode<synchronous>, transform_indices = @transform_3, window_bounds = array<i64: 1, 32>}, {pipeline_mode = #tpu.pipeline_mode<synchronous>, transform_indices = @transform_4, window_bounds = array<i64: 1, 1>}, {transform_indices = @transform_5, window_bounds = array<i64: 16, 1>}]} {
    %c0 = arith.constant 0 : index
    %c0_0 = arith.constant 0 : index
    %0 = vector.load %arg1[%c0, %c0_0] : memref<16x128xf32, #tpu.memory_space<vmem>>, vector<16x128xf32>
    %c0_1 = arith.constant 0 : index
    %c0_2 = arith.constant 0 : index
    %1 = vector.load %arg2[%c0_1, %c0_2] : memref<128x32xf32, #tpu.memory_space<vmem>>, vector<128x32xf32>
    %cst = arith.constant dense<0.000000e+00> : vector<16x32xf32>
    %2 = tpu.matmul %0, %1, %cst {dimension_numbers = #tpu.dot_dimension_numbers<[1], [0], [0], [1], [0, 0, 1, 1], [], []>} : vector<16x128xf32>, vector<128x32xf32>, vector<16x32xf32> -> vector<16x32xf32>
    %c0_3 = arith.constant 0 : index
    %c0_4 = arith.constant 0 : index
    %3 = vector.load %arg3[%c0_3, %c0_4] : memref<1x32xf32, #tpu.memory_space<vmem>>, vector<1x32xf32>
    %4 = vector.broadcast %3 : vector<1x32xf32> to vector<16x32xf32>
    %5 = arith.addf %2, %4 : vector<16x32xf32>
    %cst_5 = arith.constant 1.000000e-01 : f32
    %6 = vector.broadcast %cst_5 : f32 to vector<16x32xf32>
    %7 = arith.mulf %6, %5 : vector<16x32xf32>
    %8 = arith.maximumf %5, %7 : vector<16x32xf32>
    %c0_6 = arith.constant 0 : index
    %c0_7 = arith.constant 0 : index
    %9 = vector.load %arg4[%c0_6, %c0_7] : memref<1x32xf32, #tpu.memory_space<vmem>>, vector<1x32xf32>
    %10 = vector.broadcast %9 : vector<1x32xf32> to vector<16x32xf32>
    %11 = arith.mulf %8, %10 : vector<16x32xf32>
    %cst_8 = arith.constant dense<0.000000e+00> : vector<16xf32>
    %12 = vector.multi_reduction <add>, %11, %cst_8 [1] : vector<16x32xf32> to vector<16xf32>
    %13 = vector.shape_cast %12 : vector<16xf32> to vector<16x1xf32>
    %c0_9 = arith.constant 0 : index
    %c0_10 = arith.constant 0 : index
    %14 = vector.load %arg5[%c0_9, %c0_10] : memref<1x1xf32, #tpu.memory_space<vmem>>, vector<1x1xf32>
    %15 = vector.broadcast %14 : vector<1x1xf32> to vector<16x1xf32>
    %16 = arith.addf %13, %15 : vector<16x1xf32>
    %17 = arith.negf %16 : vector<16x1xf32>
    %18 = math.exp %17 : vector<16x1xf32>
    %cst_11 = arith.constant 1.000000e+00 : f32
    %19 = vector.broadcast %cst_11 : f32 to vector<16x1xf32>
    %20 = arith.addf %19, %18 : vector<16x1xf32>
    %21 = arith.divf %19, %20 : vector<16x1xf32>
    %c0_12 = arith.constant 0 : index
    %c0_13 = arith.constant 0 : index
    %22 = vector.load %arg6[%c0_12, %c0_13] : memref<16x1xf32, #tpu.memory_space<vmem>>, vector<16x1xf32>
    tpu.vector_store %arg6[%c0_12, %c0_13], %21 {strides = array<i32>} : memref<16x1xf32, #tpu.memory_space<vmem>>, vector<16x1xf32>,
    return
  }
  func.func @transform_0(%arg0: i32) -> (i32, i32) {
    %c0_i32 = arith.constant 0 : i32
    %c0_i32_0 = arith.constant 0 : i32
    return %arg0, %c0_i32 : i32, i32
  }
  func.func @transform_1(%arg0: i32) -> (i32, i32) {
    %c0_i32 = arith.constant 0 : i32
    %c0_i32_0 = arith.constant 0 : i32
    %c0_i32_1 = arith.constant 0 : i32
    return %c0_i32, %c0_i32_0 : i32, i32
  }
  func.func @transform_2(%arg0: i32) -> (i32, i32) {
    %c0_i32 = arith.constant 0 : i32
    %c0_i32_0 = arith.constant 0 : i32
    %c0_i32_1 = arith.constant 0 : i32
    return %c0_i32, %c0_i32_0 : i32, i32
  }
  func.func @transform_3(%arg0: i32) -> (i32, i32) {
    %c0_i32 = arith.constant 0 : i32
    %c0_i32_0 = arith.constant 0 : i32
    %c0_i32_1 = arith.constant 0 : i32
    return %c0_i32, %c0_i32_0 : i32, i32
  }
  func.func @transform_4(%arg0: i32) -> (i32, i32) {
    %c0_i32 = arith.constant 0 : i32
    %c0_i32_0 = arith.constant 0 : i32
    %c0_i32_1 = arith.constant 0 : i32
    return %c0_i32, %c0_i32_0 : i32, i32
  }
  func.func @transform_5(%arg0: i32) -> (i32, i32) {
    %c0_i32 = arith.constant 0 : i32
    %c0_i32_0 = arith.constant 0 : i32
    return %arg0, %c0_i32 : i32, i32
  }
}

</mosaic_0001>

<llo_original>
// kernel: tpu_custom_call.1
$region0: #{tpu_custom_call.1}
  #allocation0 [shape = 'u32[]', space=smem, size = 0x4, offset = 0x4, fixed_abs, tag = 'smem constant byte address 0x4 - core index']
  #allocation1 [shape = 'u32[72,128]{1,0:T(1,128)}', space=vmem, size = 0x9000, scoped, tag = 'internal scratch']
  #allocation2 [shape = 'f32[1,1]{1,0:T(1,128)S(1)}', space=vmem, size = 0x200, scoped, tag = 'scoped memory for tpu_custom_call.1']
  %s0 = inlined_call_operand.vmem [shape: f32[16,128], index: 0, kind: input, shape index: {}]
  %s1 = inlined_call_operand.vmem [shape: f32[128,32], index: 1, kind: input, shape index: {}]
  %s2 = inlined_call_operand.vmem [shape: f32[1,32], index: 2, kind: input, shape index: {}]
  %s3 = inlined_call_operand.vmem [shape: f32[1,32], index: 3, kind: input, shape index: {}]
  %s4 = inlined_call_operand.<no memory space> [shape: f32[1,1], index: 4, kind: input, shape index: {}]
  %s5 = inlined_call_operand.vmem [shape: f32[16,1], index: 5, kind: output, shape index: {}]
  %s6 = sld [smem:[#allocation0]]
  $region30: #{tpu_custom_call.1} parent=0
    _
  %s8 = ssub.s32 1, %s6
  %s9 = scalar_select 0, %s8, %s6
  %v10 = vstv %s4
  %11 = vst [vmem:[#allocation2] sm:$0x1] %v10
  // Predicated region
  $region2: #{tpu_custom_call.1} parent=0 // pred_check
    _
  $region3: #{tpu_custom_call.1} parent=0 // pred_check_branch
    %13 = sbr.rel (0) target = $region5
  $region4: #{tpu_custom_call.1} parent=0 // pred_region
    _
  $region5: #{tpu_custom_call.1} parent=0 // pred_fallthru
    _
  // Predicated region
  $region6: #{tpu_custom_call.1} parent=0 // pred_check
    _
  $region7: #{tpu_custom_call.1} parent=0 // pred_check_branch
    %15 = sbr.rel (0) target = $region9
  $region8: #{tpu_custom_call.1} parent=0 // pred_region
    _
  $region9: #{tpu_custom_call.1} parent=0 // pred_fallthru
    _
  // Predicated region
  $region10: #{tpu_custom_call.1} parent=0 // pred_check
    _
  $region11: #{tpu_custom_call.1} parent=0 // pred_check_branch
    %17 = sbr.rel (0) target = $region13
  $region12: #{tpu_custom_call.1} parent=0 // pred_region
    _
  $region13: #{tpu_custom_call.1} parent=0 // pred_fallthru
    _
  // Predicated region
  $region14: #{tpu_custom_call.1} parent=0 // pred_check
    _
  $region15: #{tpu_custom_call.1} parent=0 // pred_check_branch
    %19 = sbr.rel (0) target = $region17
  $region16: #{tpu_custom_call.1} parent=0 // pred_region
    _
  $region17: #{tpu_custom_call.1} parent=0 // pred_fallthru
    _
  // Predicated region
  $region18: #{tpu_custom_call.1} parent=0 // pred_check
    _
  $region19: #{tpu_custom_call.1} parent=0 // pred_check_branch
    %21 = sbr.rel (0) target = $region21
  $region20: #{tpu_custom_call.1} parent=0 // pred_region
    _
  $region21: #{tpu_custom_call.1} parent=0 // pred_fallthru
    _
  %v22 = vld [vmem:[%s0] sm:$0xff]
  %v23 = vld [vmem:[%s0 + $0x8] sm:$0xff]
  %v24 = vld [vmem:[%s1] sm:$0xff]
  %v25 = vld [vmem:[%s1 + $0x8] sm:$0xff]
  %v26 = vld [vmem:[%s1 + $0x10] sm:$0xff]
  %v27 = vld [vmem:[%s1 + $0x18] sm:$0xff]
  %v28 = vld [vmem:[%s1 + $0x20] sm:$0xff]
  %v29 = vld [vmem:[%s1 + $0x28] sm:$0xff]
  %v30 = vld [vmem:[%s1 + $0x30] sm:$0xff]
  %v31 = vld [vmem:[%s1 + $0x38] sm:$0xff]
  %v32 = vld [vmem:[%s1 + $0x40] sm:$0xff]
  %v33 = vld [vmem:[%s1 + $0x48] sm:$0xff]
  %v34 = vld [vmem:[%s1 + $0x50] sm:$0xff]
  %v35 = vld [vmem:[%s1 + $0x58] sm:$0xff]
  %v36 = vld [vmem:[%s1 + $0x60] sm:$0xff]
  %v37 = vld [vmem:[%s1 + $0x68] sm:$0xff]
  %v38 = vld [vmem:[%s1 + $0x70] sm:$0xff]
  %v39 = vld [vmem:[%s1 + $0x78] sm:$0xff]
  %v40 = vld [vmem:[%s2] sm:$0x1]
  %v42 = vperm.slane %v40, 0
  %44 = vmatpush.msra.mxu0 %v39
  %45 = vmatpush.msra.mxu0 %v38
  %46 = vmatpush.msra.mxu0 %v37
  %47 = vmatpush.msra.mxu0 %v36
  %48 = vmatpush.msra.mxu0 %v35
  %49 = vmatpush.msra.mxu0 %v34
  %50 = vmatpush.msra.mxu0 %v33
  %51 = vmatpush.msra.mxu0 %v32
  %52 = vmatpush.msra.mxu0 %v31
  %53 = vmatpush.msra.mxu0 %v30
  %54 = vmatpush.msra.mxu0 %v29
  %55 = vmatpush.msra.mxu0 %v28
  %56 = vmatpush.msra.mxu0 %v27
  %57 = vmatpush.msra.mxu0 %v26
  %58 = vmatpush.msra.mxu0 %v25
  %59 = vmatpush.msra.mxu0 %v24
  %60 = vmatmul.f32.gmra.mxu0 %v22
  %v61 = vpop.f32.mrf.mxu0
  %v62 = vadd.f32 %v42, %v61
  %63 = vmatmul.f32.gmra.mxu0 %v23
  %v64 = vpop.f32.mrf.mxu0
  %v65 = vadd.f32 %v42, %v64
  %66 = vdwg.mxu0
  %v67 = vmul.f32 %v62, 0.1
  %v68 = vmul.f32 %v65, 0.1
  %v69 = vmax.f32 %v62, %v67
  %v70 = vmax.f32 %v65, %v68
  %v71 = vld [vmem:[%s3] sm:$0x1]
  %v73 = vperm.slane %v71, 0
  %v75 = vmul.f32 %v69, %v73
  %v76 = vmul.f32 %v70, %v73
  %vm77 = vcmask 261120
  %v78 = vsel %vm77, %v75, 0.0
  %79 = vadd.xlane.f32.xlu0 %v78
  %v80 = vpop.xlane.xlu0 %79
  %v81 = vsel %vm77, %v76, 0.0
  %82 = vadd.xlane.f32.xlu0 %v81
  %v83 = vpop.xlane.xlu0 %82
  %v84 = vld [vmem:[#allocation2] sm:$0x1]
  %v86 = vperm.slane %v84, 0
  %v88 = vadd.f32 %v80, %v86
  %v89 = vadd.f32 %v83, %v86
  %v90 = vxor.u32 %v88, 2147483648
  %v91 = vxor.u32 %v89, 2147483648
  %v92 = vmul.f32 %v90, 1.442695
  %v93 = vpow.pop %v92
  %v94 = vmul.f32 %v91, 1.442695
  %v95 = vpow.pop %v94
  %v96 = vadd.f32 %v93, 1.0
  %v97 = vadd.f32 %v95, 1.0
  %v98 = vrcp.pop %v96
  %v99 = vmul.f32 %v96, %v98
  %v100 = vsub.f32 1.0, %v99
  %v101 = vmul.f32 %v98, %v100
  %v102 = vadd.f32 %v98, %v101
  %vm103 = vweird.f32 %v96
  %vm104 = vweird.f32 %v98
  %vm105 = vmor %vm103, %vm104
  %v106 = vsel %vm105, %v98, %v102
  %v107 = vand.u32 2147483647, %v96
  %vm108 = vcmp.eq.f32.partialorder %v107, 8.507059e+37
  %v109 = vand.u32 %v96, 2147483648
  %v110 = vor.u32 1.1754944e-38, %v109
  %v111 = vsel %vm108, %v110, %v106
  %v112 = vmul.f32 1.0, %v111
  %v113 = vrcp.pop %v97
  %v114 = vmul.f32 %v97, %v113
  %v115 = vsub.f32 1.0, %v114
  %v116 = vmul.f32 %v113, %v115
  %v117 = vadd.f32 %v113, %v116
  %vm118 = vweird.f32 %v97
  %vm119 = vweird.f32 %v113
  %vm120 = vmor %vm118, %vm119
  %v121 = vsel %vm120, %v113, %v117
  %v122 = vand.u32 2147483647, %v97
  %vm123 = vcmp.eq.f32.partialorder %v122, 8.507059e+37
  %v124 = vand.u32 %v97, 2147483648
  %v125 = vor.u32 1.1754944e-38, %v124
  %v126 = vsel %vm123, %v125, %v121
  %v127 = vmul.f32 1.0, %v126
  %vm128 = vcmask 7168
  %129 = vst.msk [vmem:[%s5] sm:$0xff] %vm128, %v112
  %130 = vst.msk [vmem:[%s5 + $0x8] sm:$0xff] %vm128, %v127
  // Predicated region
  $region22: #{tpu_custom_call.1} parent=0 // pred_check
    _
  $region23: #{tpu_custom_call.1} parent=0 // pred_check_branch
    %132 = sbr.rel (0) target = $region25
  $region24: #{tpu_custom_call.1} parent=0 // pred_region
    _
  $region25: #{tpu_custom_call.1} parent=0 // pred_fallthru
    _
  // Predicated region
  $region26: #{tpu_custom_call.1} parent=0 // pred_check
    _
  $region27: #{tpu_custom_call.1} parent=0 // pred_check_branch
    %134 = sbr.rel (0) target = $region29
  $region28: #{tpu_custom_call.1} parent=0 // pred_region
    _
  $region29: #{tpu_custom_call.1} parent=0 // pred_fallthru
    _

</llo_original>
